<compile_context>
chip_gen: v7x
topology: tpu7x:2x2x1
jax: 0.10.0
libtpu: 0.0.40
codegen_flags: <defaults>
</compile_context>

<pallas_src>
import functools

import jax
import jax.numpy as jnp
from jax import lax
from jax.experimental import pallas as pl
from jax.experimental.pallas import tpu as pltpu

_LANES = 128
# Per-input, per-pipeline-buffer tile budget. 2 inputs x 2 buffers x 4 MiB = 16 MiB.
_TILE_BYTES_BUDGET = 4 * 1024 * 1024
_VMEM_LIMIT_BYTES = 32 * 1024 * 1024


def _sigmoid_f32(x):
    # sigmoid(x) == 0.5 * (tanh(0.5 * x) + 1): single EUP transcendental, no divide.
    return 0.5 * (jnp.tanh(0.5 * x.astype(jnp.float32)) + 1.0)


def _dice_kernel(pred_ref, true_ref, out_ref, *,
                 rows, block_rows, steps_per_shard, total_steps, needs_mask):
    """Accumulates lane-partial sums into the resident (1, 2/8, 128) output block."""
    c = pl.program_id(0)   # core shard ("parallel")
    i = pl.program_id(1)   # row-block step within the shard ("arbitrary")

    @pl.when(i == 0)
    def _init():
        out_ref[...] = jnp.zeros_like(out_ref)

    p = _sigmoid_f32(pred_ref[...])            # native-dtype load, f32 compute
    t = true_ref[...].astype(jnp.float32)

    def _accumulate(pv, tv):
        # Sublane (VPU) reduce per step; lane axis stays resident in the output block.
        out_ref[0, 0:1, :] += jnp.sum(pv * tv, axis=0, keepdims=True)
        out_ref[0, 1:2, :] += jnp.sum(pv + tv, axis=0, keepdims=True)   # fused denom

    if needs_mask:
        g = c * steps_per_shard + i            # global row-block index (unclamped)

        @pl.when(g < total_steps - 1)
        def _full_tile():
            _accumulate(p, t)

        @pl.when(g >= total_steps - 1)
        def _tail_tile():
            # Block-local row index vs. remaining valid rows.  valid_rows <= 0 for
            # duplicated (clamped) out-of-range blocks -> whole block masked out.
            row_idx = lax.broadcasted_iota(jnp.int32, p.shape, 0)
            valid_rows = rows - g * block_rows
            valid = row_idx < valid_rows
            _accumulate(jnp.where(valid, p, 0.0), jnp.where(valid, t, 0.0))
    else:
        _accumulate(p, t)


def dice_loss(y_pred, y_true, smooth=1.0, *, block_rows_cap=None):
    """Pallas TPU DiceLoss forward: 1 - (2*sum(sig(p)*t)+s) / (sum(sig(p))+sum(t)+s)."""
    assert y_pred.shape == y_true.shape

    total = int(y_pred.size)
    if total == 0:
        return jnp.float32(0.0)                # dice = smooth/smooth = 1 -> loss 0

    pred_flat = y_pred.reshape(-1)             # native dtype, no upcast in the wrapper
    true_flat = y_true.reshape(-1)

    main = (total // _LANES) * _LANES
    rows = main // _LANES
    tail_len = total - main

    # Ragged tail (< 128 elements): tiny wrapper-side reduction; no jnp.pad full copy.
    if tail_len:
        tp = _sigmoid_f32(pred_flat[main:])
        tt = true_flat[main:].astype(jnp.float32)
        tail_inter = jnp.sum(tp * tt)
        tail_denom = jnp.sum(tp + tt)
    else:
        tail_inter = jnp.float32(0.0)
        tail_denom = jnp.float32(0.0)

    if rows == 0:
        inter = tail_inter
        denom = tail_denom
    else:
        dtype_bytes = jnp.dtype(y_pred.dtype).itemsize
        if block_rows_cap is None:
            block_rows_cap = _TILE_BYTES_BUDGET // (_LANES * dtype_bytes)
        block_rows_cap = max(8, (block_rows_cap // 8) * 8)

        if rows <= block_rows_cap:
            block_rows = rows                  # block == full array dim (always legal)
        else:
            block_rows = block_rows_cap        # multiple of 8

        total_steps = -(-rows // block_rows)
        # Dual-TensorCore sharding (v7x); degenerates to a serial split on v5e/v6e.
        num_shards = 2 if total_steps >= 2 else 1
        steps_per_shard = -(-total_steps // num_shards)
        covered_steps = num_shards * steps_per_shard
        needs_mask = (rows % block_rows != 0) or (covered_steps != total_steps)

        if covered_steps == total_steps:
            def in_map(c, i, _spc=steps_per_shard):
                return (c * _spc + i, 0)
        else:
            # Clamp duplicated out-of-range blocks to the last real block; their
            # contribution is masked to zero inside the kernel.
            def in_map(c, i, _spc=steps_per_shard, _last=total_steps - 1):
                return (jnp.minimum(c * _spc + i, _last), 0)

        pred2d = pred_flat[:main].reshape(rows, _LANES)
        true2d = true_flat[:main].reshape(rows, _LANES)
        # TODO(synk): for ragged totals the [:main] slice costs one copy per tensor; a
        # fully copy-free ragged path would need 1-D blocks + in-kernel (N,)->(N/128,128)
        # relayout or a manual-DMA (pl.ANY) variant.

        partials = pl.pallas_call(
            functools.partial(_dice_kernel, rows=rows, block_rows=block_rows,
                              steps_per_shard=steps_per_shard,
                              total_steps=total_steps, needs_mask=needs_mask),
            # Row 0: lane-partial sum(sig(p)*t); row 1: lane-partial sum(sig(p)+t).
            # 8 sublanes for alignment; rows 2..7 stay zero.
            out_shape=jax.ShapeDtypeStruct((num_shards, 8, _LANES), jnp.float32),
            grid_spec=pltpu.PrefetchScalarGridSpec(
                num_scalar_prefetch=0,
                grid=(num_shards, steps_per_shard),
                in_specs=[
                    pl.BlockSpec((block_rows, _LANES), in_map),
                    pl.BlockSpec((block_rows, _LANES), in_map),
                ],
                out_specs=pl.BlockSpec((1, 8, _LANES), lambda c, i: (c, 0, 0)),
            ),
            compiler_params=pltpu.CompilerParams(
                dimension_semantics=("parallel", "arbitrary"),
                vmem_limit_bytes=_VMEM_LIMIT_BYTES),
        )(pred2d, true2d)

        # Single cross-lane / cross-shard reduce + ratio as a fused XLA epilogue.
        inter = jnp.sum(partials[:, 0, :]) + tail_inter
        denom = jnp.sum(partials[:, 1, :]) + tail_denom

    smooth = jnp.float32(smooth)
    dice = (2.0 * inter + smooth) / (denom + smooth)
    return 1.0 - dice


def _dice_loss_ref(y_pred, y_true, smooth=1.0):
    p = jax.nn.sigmoid(y_pred.astype(jnp.float32))
    t = y_true.astype(jnp.float32)
    inter = jnp.sum(p * t)
    dice = (2.0 * inter + smooth) / (jnp.sum(p) + jnp.sum(t) + smooth)
    return 1.0 - dice


if __name__ == "__main__":
    key = jax.random.PRNGKey(0)
    k1, k2, k3, k4, k5, k6, k7, k8 = jax.random.split(key, 8)

    # 1) Small UNet-head shape (B, C, H, W) = (2, 4, 16, 16): single tile, no mask.
    yp1 = jax.random.normal(k1, (2, 4, 16, 16), dtype=jnp.float32)           # logits
    yt1 = (jax.random.uniform(k2, (2, 4, 16, 16)) > 0.5).astype(jnp.float32)
    loss1 = dice_loss(yp1, yt1, smooth=1.0)
    jax.block_until_ready(loss1)
    ref1 = _dice_loss_ref(yp1, yt1, smooth=1.0)
    assert jnp.allclose(loss1, ref1, rtol=1e-4, atol=1e-5), (loss1, ref1)

    # 2) bf16 inputs (no wrapper upcast), dtype-aware block_rows.
    yp2 = jax.random.normal(k3, (4, 4, 128, 128), dtype=jnp.bfloat16)
    yt2 = (jax.random.uniform(k4, (4, 4, 128, 128)) > 0.5).astype(jnp.bfloat16)
    loss2 = dice_loss(yp2, yt2, smooth=1.0)
    jax.block_until_ready(loss2)
    ref2 = _dice_loss_ref(yp2, yt2, smooth=1.0)
    assert jnp.allclose(loss2, ref2, rtol=1e-4, atol=1e-5), (loss2, ref2)

    # 3) Ragged size (total % 128 != 0): wrapper-side tail reduction (no pad copy).
    yp3 = jax.random.normal(k5, (2, 3, 37, 53), dtype=jnp.float32)
    yt3 = (jax.random.uniform(k6, (2, 3, 37, 53)) > 0.5).astype(jnp.float32)
    loss3 = dice_loss(yp3, yt3, smooth=1.0)
    jax.block_until_ready(loss3)
    ref3 = _dice_loss_ref(yp3, yt3, smooth=1.0)
    assert jnp.allclose(loss3, ref3, rtol=1e-4, atol=1e-5), (loss3, ref3)

    # 4) Forced small block cap: exercises multi-step grid, 2-way core sharding,
    #    clamped duplicate block and partial-last-block row mask.
    yp4 = jax.random.normal(k7, (2, 4, 64, 128), dtype=jnp.float32)
    yt4 = (jax.random.uniform(k8, (2, 4, 64, 128)) > 0.5).astype(jnp.float32)
    loss4 = dice_loss(yp4, yt4, smooth=1.0, block_rows_cap=120)
    jax.block_until_ready(loss4)
    ref4 = _dice_loss_ref(yp4, yt4, smooth=1.0)
    assert jnp.allclose(loss4, ref4, rtol=1e-4, atol=1e-5), (loss4, ref4)

    print("KERNEL_OK")
</pallas_src>

<mosaic_0001>
module attributes {stable_mosaic.version = 11 : i64} {
  func.func @_dice_kernel(%arg0: i32, %arg1: i32, %arg2: memref<16x128xf32, #tpu.memory_space<vmem>>, %arg3: memref<16x128xf32, #tpu.memory_space<vmem>>, %arg4: memref<1x8x128xf32, #tpu.memory_space<vmem>>) attributes {dimension_semantics = [#tpu.dimension_semantics<parallel>, #tpu.dimension_semantics<arbitrary>], iteration_bounds = array<i64: 1, 1>, scalar_prefetch = 0 : i64, scratch_operands = 0 : i64, tpu.core_type = #tpu.core_type<tc>, window_params = [{transform_indices = @transform_0, window_bounds = array<i64: 16, 128>}, {transform_indices = @transform_1, window_bounds = array<i64: 16, 128>}, {transform_indices = @transform_2, window_bounds = array<i64: 1, 8, 128>}]} {
    %c0_i32 = arith.constant 0 : i32
    %0 = arith.cmpi eq, %arg1, %c0_i32 : i32
    %1 = arith.extui %0 : i1 to i32
    %c0_i32_0 = arith.constant 0 : i32
    %2 = arith.cmpi ne, %1, %c0_i32_0 : i32
    scf.if %2 {
      %cst_19 = arith.constant 0.000000e+00 : f32
      %30 = vector.broadcast %cst_19 : f32 to vector<1x8x128xf32>
      %c0_20 = arith.constant 0 : index
      %c0_21 = arith.constant 0 : index
      %c0_22 = arith.constant 0 : index
      %31 = vector.load %arg4[%c0_20, %c0_21, %c0_22] : memref<1x8x128xf32, #tpu.memory_space<vmem>>, vector<1x8x128xf32>
      tpu.vector_store %arg4[%c0_20, %c0_21, %c0_22], %30 {strides = array<i32>} : memref<1x8x128xf32, #tpu.memory_space<vmem>>, vector<1x8x128xf32>,
    } else {
    }
    %c0 = arith.constant 0 : index
    %c0_1 = arith.constant 0 : index
    %3 = vector.load %arg2[%c0, %c0_1] : memref<16x128xf32, #tpu.memory_space<vmem>>, vector<16x128xf32>
    %cst = arith.constant 5.000000e-01 : f32
    %4 = vector.broadcast %cst : f32 to vector<16x128xf32>
    %5 = arith.mulf %4, %3 : vector<16x128xf32>
    %6 = math.tanh %5 : vector<16x128xf32>
    %cst_2 = arith.constant 1.000000e+00 : f32
    %7 = vector.broadcast %cst_2 : f32 to vector<16x128xf32>
    %8 = arith.addf %6, %7 : vector<16x128xf32>
    %cst_3 = arith.constant 5.000000e-01 : f32
    %9 = vector.broadcast %cst_3 : f32 to vector<16x128xf32>
    %10 = arith.mulf %9, %8 : vector<16x128xf32>
    %c0_4 = arith.constant 0 : index
    %c0_5 = arith.constant 0 : index
    %11 = vector.load %arg3[%c0_4, %c0_5] : memref<16x128xf32, #tpu.memory_space<vmem>>, vector<16x128xf32>
    %c0_6 = arith.constant 0 : index
    %c0_7 = arith.constant 0 : index
    %c0_8 = arith.constant 0 : index
    %12 = vector.load %arg4[%c0_6, %c0_7, %c0_8] : memref<1x8x128xf32, #tpu.memory_space<vmem>>, vector<1x1x128xf32>
    %13 = vector.shape_cast %12 : vector<1x1x128xf32> to vector<1x128xf32>
    %14 = arith.mulf %10, %11 : vector<16x128xf32>
    %cst_9 = arith.constant dense<0.000000e+00> : vector<128xf32>
    %15 = vector.multi_reduction <add>, %14, %cst_9 [0] : vector<16x128xf32> to vector<128xf32>
    %16 = vector.shape_cast %15 : vector<128xf32> to vector<1x128xf32>
    %17 = arith.addf %13, %16 : vector<1x128xf32>
    %c0_10 = arith.constant 0 : index
    %c0_11 = arith.constant 0 : index
    %c0_12 = arith.constant 0 : index
    %18 = vector.load %arg4[%c0_10, %c0_11, %c0_12] : memref<1x8x128xf32, #tpu.memory_space<vmem>>, vector<1x1x128xf32>
    %19 = vector.shape_cast %18 : vector<1x1x128xf32> to vector<1x128xf32>
    %20 = vector.shape_cast %17 : vector<1x128xf32> to vector<1x1x128xf32>
    tpu.vector_store %arg4[%c0_10, %c0_11, %c0_12], %20 {strides = array<i32>} : memref<1x8x128xf32, #tpu.memory_space<vmem>>, vector<1x1x128xf32>,
    %c0_13 = arith.constant 0 : index
    %c1 = arith.constant 1 : index
    %c0_14 = arith.constant 0 : index
    %21 = vector.load %arg4[%c0_13, %c1, %c0_14] : memref<1x8x128xf32, #tpu.memory_space<vmem>>, vector<1x1x128xf32>
    %22 = vector.shape_cast %21 : vector<1x1x128xf32> to vector<1x128xf32>
    %23 = arith.addf %10, %11 : vector<16x128xf32>
    %cst_15 = arith.constant dense<0.000000e+00> : vector<128xf32>
    %24 = vector.multi_reduction <add>, %23, %cst_15 [0] : vector<16x128xf32> to vector<128xf32>
    %25 = vector.shape_cast %24 : vector<128xf32> to vector<1x128xf32>
    %26 = arith.addf %22, %25 : vector<1x128xf32>
    %c0_16 = arith.constant 0 : index
    %c1_17 = arith.constant 1 : index
    %c0_18 = arith.constant 0 : index
    %27 = vector.load %arg4[%c0_16, %c1_17, %c0_18] : memref<1x8x128xf32, #tpu.memory_space<vmem>>, vector<1x1x128xf32>
    %28 = vector.shape_cast %27 : vector<1x1x128xf32> to vector<1x128xf32>
    %29 = vector.shape_cast %26 : vector<1x128xf32> to vector<1x1x128xf32>
    tpu.vector_store %arg4[%c0_16, %c1_17, %c0_18], %29 {strides = array<i32>} : memref<1x8x128xf32, #tpu.memory_space<vmem>>, vector<1x1x128xf32>,
    return
  }
  func.func @transform_0(%arg0: i32, %arg1: i32) -> (i32, i32) {
    %c1_i32 = arith.constant 1 : i32
    %0 = arith.muli %arg0, %c1_i32 : i32
    %1 = arith.addi %0, %arg1 : i32
    %c0_i32 = arith.constant 0 : i32
    %c0_i32_0 = arith.constant 0 : i32
    return %1, %c0_i32 : i32, i32
  }
  func.func @transform_1(%arg0: i32, %arg1: i32) -> (i32, i32) {
    %c1_i32 = arith.constant 1 : i32
    %0 = arith.muli %arg0, %c1_i32 : i32
    %1 = arith.addi %0, %arg1 : i32
    %c0_i32 = arith.constant 0 : i32
    %c0_i32_0 = arith.constant 0 : i32
    return %1, %c0_i32 : i32, i32
  }
  func.func @transform_2(%arg0: i32, %arg1: i32) -> (i32, i32, i32) {
    %c0_i32 = arith.constant 0 : i32
    %c0_i32_0 = arith.constant 0 : i32
    %c0_i32_1 = arith.constant 0 : i32
    return %arg0, %c0_i32, %c0_i32_0 : i32, i32, i32
  }
}

</mosaic_0001>

<llo_original>
// kernel: tpu_custom_call.1
$region0: #{tpu_custom_call.1}
  #allocation0 [shape = 'u32[]', space=smem, size = 0x4, offset = 0x4, fixed_abs, tag = 'smem constant byte address 0x4 - core index']
  #allocation1 [shape = 'u32[144,128]{1,0:T(1,128)}', space=vmem, size = 0x12000, scoped, tag = 'internal scratch']
  %s0 = inlined_call_operand.hbm [shape: f32[16,128], index: 0, kind: input, shape index: {}]
  %s1 = inlined_call_operand.hbm [shape: f32[16,128], index: 1, kind: input, shape index: {}]
  %s2 = inlined_call_operand.hbm [shape: f32[1,8,128], index: 2, kind: output, shape index: {}]
  %s3 = sld [smem:[#allocation0]]
  $region30: #{tpu_custom_call.1} parent=0
    _
  %s5 = ssub.s32 1, %s3
  %s6 = scalar_select 0, %s5, %s3
  $region1: #{tpu_custom_call.1} parent=0
    #allocation2 [shape = 'u8[8192]{0}', space=vmem, size = 0x2000, scoped, tag = 'input window, operand 0, single buffered']
    #allocation3 [shape = 's32[1]{0}', space=sflag, size = 0x4, scoped, tag = 'scoped memory for tpu_custom_call.1']
    #allocation4 [shape = 's32[1]{0}', space=sflag, size = 0x4, scoped, tag = 'scoped memory for tpu_custom_call.1']
    #allocation5 [shape = 'u8[8192]{0}', space=vmem, size = 0x2000, scoped, tag = 'input window, operand 1, single buffered']
    #allocation6 [shape = 's32[1]{0}', space=sflag, size = 0x4, scoped, tag = 'scoped memory for tpu_custom_call.1']
    #allocation7 [shape = 'u8[4096]{0}', space=vmem, size = 0x1000, scoped, tag = 'output window, operand 0, single buffered']
    %7 = vsyncpa [#allocation3], 0
    %8 = vsyncpa [#allocation6], 0
    %9 = vsyncpa [#allocation4], 0
    // Predicated region
    $region2: #{tpu_custom_call.1} parent=1 // pred_check
      _
    $region3: #{tpu_custom_call.1} parent=1 // pred_check_branch
      %11 = sbr.rel (0) target = $region5
    $region4: #{tpu_custom_call.1} parent=1 // pred_region
      %s12 = sadd.s32 0, 0
      %s13 = smul.u32 2, %s12
      %s15 = ssub.s32 256, 256
      %16 = vsyncadd [#allocation3], %s15
      %s17 = smul.addr %s13, 128
      %s18 = scalar_lea.hbm %s0, %s17
      %s19 = sshll.u32 [#allocation2], 4
      %s20 = int_to_ptr.vmem [resolvable:$true] %s19
      %25 = dma.hbm_to_vmem [thread:$0]  %s18, 256, %s20, [#allocation3], 128, 128, 8
    $region5: #{tpu_custom_call.1} parent=1 // pred_fallthru
      _
    // Predicated region
    $region6: #{tpu_custom_call.1} parent=1 // pred_check
      _
    $region7: #{tpu_custom_call.1} parent=1 // pred_check_branch
      %27 = sbr.rel (0) target = $region9
    $region8: #{tpu_custom_call.1} parent=1 // pred_region
      %s28 = sadd.s32 0, 0
      %s29 = smul.u32 2, %s28
      %s31 = ssub.s32 256, 256
      %32 = vsyncadd [#allocation6], %s31
      %s33 = smul.addr %s29, 128
      %s34 = scalar_lea.hbm %s1, %s33
      %s35 = sshll.u32 [#allocation5], 4
      %s36 = int_to_ptr.vmem [resolvable:$true] %s35
      %41 = dma.hbm_to_vmem [thread:$0]  %s34, 256, %s36, [#allocation6], 128, 128, 8
    $region9: #{tpu_custom_call.1} parent=1 // pred_fallthru
      _
    // Predicated region
    $region10: #{tpu_custom_call.1} parent=1 // pred_check
      _
    $region11: #{tpu_custom_call.1} parent=1 // pred_check_branch
      %43 = sbr.rel (0) target = $region13
    $region12: #{tpu_custom_call.1} parent=1 // pred_region
      %44 = dma.done [#allocation3], 256
    $region13: #{tpu_custom_call.1} parent=1 // pred_fallthru
      _
    // Predicated region
    $region14: #{tpu_custom_call.1} parent=1 // pred_check
      _
    $region15: #{tpu_custom_call.1} parent=1 // pred_check_branch
      %46 = sbr.rel (0) target = $region17
    $region16: #{tpu_custom_call.1} parent=1 // pred_region
      %47 = dma.done [#allocation6], 256
    $region17: #{tpu_custom_call.1} parent=1 // pred_fallthru
      _
    %s48 = sadd.s32 0, 0
    %s49 = smul.u32 2, %s48
    %s50 = sadd.s32 0, 0
    %s51 = smul.u32 2, %s50
    %p52 = scmp.eq.s32.totalorder 0, 0
    // Predicated region
    $region18: #{tpu_custom_call.1} parent=1 // pred_check
      %p53 = pneg %p52
    $region19: #{tpu_custom_call.1} parent=1 // pred_check_branch
      %55 = sbr.rel (%p53) target = $region21
    $region20: #{tpu_custom_call.1} parent=1 // pred_region
      %56 = vst [vmem:[#allocation7] sm:$0xff] 0.0
    $region21: #{tpu_custom_call.1} parent=1 // pred_fallthru
      _
    %v57 = vld [vmem:[#allocation2] sm:$0xff]
    %v58 = vld [vmem:[#allocation2 + $0x8] sm:$0xff]
    %v59 = vmul.f32 %v57, 0.5
    %v60 = vmul.f32 %v58, 0.5
    %v61 = vtanh.pop %v59
    %v62 = vtanh.pop %v60
    %v63 = vadd.f32 %v61, 1.0
    %v64 = vadd.f32 %v62, 1.0
    %v65 = vmul.f32 %v63, 0.5
    %v66 = vmul.f32 %v64, 0.5
    %v67 = vld [vmem:[#allocation5] sm:$0xff]
    %v68 = vld [vmem:[#allocation5 + $0x8] sm:$0xff]
    %v69 = vld [vmem:[#allocation7] sm:$0x1]
    %v70 = vmul.f32 %v65, %v67
    %v71 = vmul.f32 %v66, %v68
    %v72 = vadd.f32 %v70, %v71
    %v73 = vrot.slane %v72, 4
    %v74 = vadd.f32 %v72, %v73
    %v75 = vrot.slane %v74, 2
    %v76 = vadd.f32 %v74, %v75
    %v77 = vrot.slane %v76, 1
    %v78 = vadd.f32 %v76, %v77
    %v79 = vadd.f32 %v69, %v78
    %80 = vst [vmem:[#allocation7] sm:$0x1] %v79
    %v81 = vld [vmem:[#allocation7 + $0x1] sm:$0x1]
    %v82 = vadd.f32 %v65, %v67
    %v83 = vadd.f32 %v66, %v68
    %v84 = vadd.f32 %v82, %v83
    %v85 = vrot.slane %v84, 4
    %v86 = vadd.f32 %v84, %v85
    %v87 = vrot.slane %v86, 2
    %v88 = vadd.f32 %v86, %v87
    %v89 = vrot.slane %v88, 1
    %v90 = vadd.f32 %v88, %v89
    %v91 = vadd.f32 %v81, %v90
    %92 = vst [vmem:[#allocation7 + $0x1] sm:$0x1] %v91
    // Predicated region
    $region22: #{tpu_custom_call.1} parent=1 // pred_check
      _
    $region23: #{tpu_custom_call.1} parent=1 // pred_check_branch
      %94 = sbr.rel (0) target = $region25
    $region24: #{tpu_custom_call.1} parent=1 // pred_region
      %s96 = ssub.s32 128, 128
      %97 = vsyncadd [#allocation4], %s96
      %s99 = sshll.u32 [#allocation7], 4
      %s100 = int_to_ptr.vmem [resolvable:$true] %s99
      %102 = dma.vmem_to_hbm [thread:$0]  %s100, 128, %s2, [#allocation4]
    $region25: #{tpu_custom_call.1} parent=1 // pred_fallthru
      _
    // Predicated region
    $region26: #{tpu_custom_call.1} parent=1 // pred_check
      _
    $region27: #{tpu_custom_call.1} parent=1 // pred_check_branch
      %104 = sbr.rel (0) target = $region29
    $region28: #{tpu_custom_call.1} parent=1 // pred_region
      %105 = dma.done [#allocation4], 128
    $region29: #{tpu_custom_call.1} parent=1 // pred_fallthru
      _
    %106 = vsyncpa [#allocation3], 1
    %107 = vsyncpa [#allocation6], 1
    %108 = vsyncpa [#allocation4], 1

</llo_original>
